<compile_context>
chip_gen: v7x
topology: tpu7x:2x2x1
jax: 0.10.0
libtpu: 0.0.40
codegen_flags: <defaults>
</compile_context>

<pallas_src>
import functools

import jax
import jax.numpy as jnp
from jax.experimental import pallas as pl
from jax.experimental.pallas import tpu as pltpu


def _gelu_exact(x):
    # Matches torch.nn.functional.gelu default (erf-based, "exact") variant.
    return 0.5 * x * (1.0 + jax.lax.erf(x * (1.0 / jnp.sqrt(2.0))))


def _round_up(x, m):
    return ((x + m - 1) // m) * m


def _pick_hidden_tile(H, th):
    """Largest multiple of 128 that divides H and is <= th, else full H."""
    if H % 128 != 0:
        return H
    best = H
    t = 128
    while t <= min(th, H):
        if H % t == 0:
            best = t
        t += 128
    return best if best <= th else H


def mlp_kernel(x_ref, w_fc_ref, w_proj_ref, o_ref, acc_ref):
    # x_ref:      (tm, C)  token tile
    # w_fc_ref:   (th, C)  tile of W_fc rows   (PyTorch (out, in) layout)
    # w_proj_ref: (C, th)  tile of W_proj cols (PyTorch (out, in) layout)
    # o_ref:      (tm, C)  output tile (resident across the H axis)
    # acc_ref:    (tm, C)  f32 accumulator scratch
    k = pl.program_id(1)

    @pl.when(k == 0)
    def _():
        acc_ref[...] = jnp.zeros_like(acc_ref)

    # h_tile = x @ W_fc[kh]^T  -> (tm, th), f32 accumulation on the MXU.
    h = jax.lax.dot_general(
        x_ref[...], w_fc_ref[...],
        dimension_numbers=(((1,), (1,)), ((), ())),
        preferred_element_type=jnp.float32)
    # GELU in f32, then drop back to the input dtype for the second matmul.
    h = _gelu_exact(h).astype(x_ref.dtype)

    # Partial projection: h_tile @ W_proj[:, kh]^T -> (tm, C), accumulate f32.
    acc_ref[...] += jax.lax.dot_general(
        h, w_proj_ref[...],
        dimension_numbers=(((1,), (1,)), ((), ())),
        preferred_element_type=jnp.float32)

    @pl.when(k == pl.num_programs(1) - 1)
    def _():
        o_ref[...] = acc_ref[...].astype(o_ref.dtype)


@functools.partial(jax.jit, static_argnames=("tm", "th"))
def mlp_forward(x, w_fc, w_proj, *, tm=256, th=512):
    """x: (B, T, C). w_fc: (4C, C). w_proj: (C, 4C) — PyTorch Linear layout."""
    B, T, C = x.shape
    H = w_fc.shape[0]  # 4 * C
    M = B * T

    x2d = x.reshape(M, C)

    # Row tile: adapt to small inputs (multiple of 8), pad M up to a multiple.
    tm_eff = min(tm, _round_up(M, 8))
    M_pad = _round_up(M, tm_eff)
    if M_pad != M:
        x2d = jnp.pad(x2d, ((0, M_pad - M), (0, 0)))

    # Hidden tile: must evenly divide H and respect the lane constraint
    # (multiple of 128 or full H).
    th_eff = _pick_hidden_tile(H, th)

    grid = (M_pad // tm_eff, H // th_eff)

    itemsize = jnp.dtype(x.dtype).itemsize
    cost = pl.CostEstimate(
        flops=4 * M_pad * C * H,                # two matmuls, 2*M*C*H each
        transcendentals=M_pad * H,              # erf in the GELU
        bytes_accessed=(M_pad * C * itemsize          # x
                        + H * C * itemsize * 2        # w_fc + w_proj
                        + M_pad * C * itemsize))      # output

    out2d = pl.pallas_call(
        mlp_kernel,
        out_shape=jax.ShapeDtypeStruct((M_pad, C), x.dtype),
        grid_spec=pltpu.PrefetchScalarGridSpec(
            num_scalar_prefetch=0,
            grid=grid,
            in_specs=[
                pl.BlockSpec((tm_eff, C), lambda i, k: (i, 0)),  # x rows
                pl.BlockSpec((th_eff, C), lambda i, k: (k, 0)),  # W_fc rows
                pl.BlockSpec((C, th_eff), lambda i, k: (0, k)),  # W_proj cols
            ],
            out_specs=pl.BlockSpec((tm_eff, C), lambda i, k: (i, 0)),
            scratch_shapes=[pltpu.VMEM((tm_eff, C), jnp.float32)],
        ),
        compiler_params=pltpu.CompilerParams(
            dimension_semantics=("parallel", "arbitrary"),
            vmem_limit_bytes=64 * 1024 * 1024),
        cost_estimate=cost,
    )(x2d, w_fc, w_proj)

    return out2d[:M].reshape(B, T, C)


def reference_mlp(x, w_fc, w_proj):
    h = jnp.einsum("btc,hc->bth", x.astype(jnp.float32),
                   w_fc.astype(jnp.float32))
    h = _gelu_exact(h)
    y = jnp.einsum("bth,ch->btc", h, w_proj.astype(jnp.float32))
    return y.astype(x.dtype)


if __name__ == "__main__":
    # Small config: batch=2, seq=8, n_embd=32 -> hidden=128.
    B, T, C = 2, 8, 32
    H = 4 * C

    key = jax.random.PRNGKey(0)
    kx, kfc, kproj = jax.random.split(key, 3)

    x = jax.random.normal(kx, (B, T, C), dtype=jnp.float32)
    # PyTorch Linear layout: (out_features, in_features).
    w_fc = jax.random.normal(kfc, (H, C), dtype=jnp.float32) * (1.0 / jnp.sqrt(C))
    w_proj = jax.random.normal(kproj, (C, H), dtype=jnp.float32) * (1.0 / jnp.sqrt(H))

    y = mlp_forward(x, w_fc, w_proj)
    y = jax.block_until_ready(y)

    y_ref = reference_mlp(x, w_fc, w_proj)
    assert y.shape == (B, T, C)
    assert jnp.allclose(y, y_ref, atol=1e-4, rtol=1e-4), "mismatch vs reference"

    print("KERNEL_OK")
</pallas_src>

<mosaic_0001>
module attributes {stable_mosaic.version = 11 : i64} {
  func.func @mlp_kernel(%arg0: i32, %arg1: i32, %arg2: memref<16x32xf32, #tpu.memory_space<vmem>>, %arg3: memref<128x32xf32, #tpu.memory_space<vmem>>, %arg4: memref<32x128xf32, #tpu.memory_space<vmem>>, %arg5: memref<16x32xf32, #tpu.memory_space<vmem>>, %arg6: memref<16x32xf32, #tpu.memory_space<vmem>>) attributes {dimension_semantics = [#tpu.dimension_semantics<parallel>, #tpu.dimension_semantics<arbitrary>], iteration_bounds = array<i64: 1, 1>, scalar_prefetch = 0 : i64, scratch_operands = 1 : i64, tpu.core_type = #tpu.core_type<tc>, window_params = [{transform_indices = @transform_0, window_bounds = array<i64: 16, 32>}, {transform_indices = @transform_1, window_bounds = array<i64: 128, 32>}, {transform_indices = @transform_2, window_bounds = array<i64: 32, 128>}, {transform_indices = @transform_3, window_bounds = array<i64: 16, 32>}]} {
    %c0_i32 = arith.constant 0 : i32
    %0 = arith.cmpi eq, %arg1, %c0_i32 : i32
    %1 = arith.extui %0 : i1 to i32
    %c0_i32_0 = arith.constant 0 : i32
    %2 = arith.cmpi ne, %1, %c0_i32_0 : i32
    scf.if %2 {
      %cst_17 = arith.constant 0.000000e+00 : f32
      %24 = vector.broadcast %cst_17 : f32 to vector<16x32xf32>
      %c0_18 = arith.constant 0 : index
      %c0_19 = arith.constant 0 : index
      %25 = vector.load %arg6[%c0_18, %c0_19] : memref<16x32xf32, #tpu.memory_space<vmem>>, vector<16x32xf32>
      tpu.vector_store %arg6[%c0_18, %c0_19], %24 {strides = array<i32>} : memref<16x32xf32, #tpu.memory_space<vmem>>, vector<16x32xf32>,
    } else {
    }
    %c0 = arith.constant 0 : index
    %c0_1 = arith.constant 0 : index
    %3 = vector.load %arg2[%c0, %c0_1] : memref<16x32xf32, #tpu.memory_space<vmem>>, vector<16x32xf32>
    %c0_2 = arith.constant 0 : index
    %c0_3 = arith.constant 0 : index
    %4 = vector.load %arg3[%c0_2, %c0_3] : memref<128x32xf32, #tpu.memory_space<vmem>>, vector<128x32xf32>
    %cst = arith.constant dense<0.000000e+00> : vector<16x128xf32>
    %5 = tpu.matmul %3, %4, %cst {dimension_numbers = #tpu.dot_dimension_numbers<[1], [1], [0], [0], [0, 0, 1, 0], [], []>} : vector<16x32xf32>, vector<128x32xf32>, vector<16x128xf32> -> vector<16x128xf32>
    %cst_4 = arith.constant 5.000000e-01 : f32
    %6 = vector.broadcast %cst_4 : f32 to vector<16x128xf32>
    %7 = arith.mulf %6, %5 : vector<16x128xf32>
    %cst_5 = arith.constant 2.000000e+00 : f32
    %8 = math.sqrt %cst_5 : f32
    %cst_6 = arith.constant 1.000000e+00 : f32
    %9 = arith.divf %cst_6, %8 : f32
    %10 = vector.broadcast %9 : f32 to vector<16x128xf32>
    %11 = arith.mulf %5, %10 : vector<16x128xf32>
    %12 = math.erf %11 : vector<16x128xf32>
    %cst_7 = arith.constant 1.000000e+00 : f32
    %13 = vector.broadcast %cst_7 : f32 to vector<16x128xf32>
    %14 = arith.addf %13, %12 : vector<16x128xf32>
    %15 = arith.mulf %7, %14 : vector<16x128xf32>
    %c0_8 = arith.constant 0 : index
    %c0_9 = arith.constant 0 : index
    %16 = vector.load %arg6[%c0_8, %c0_9] : memref<16x32xf32, #tpu.memory_space<vmem>>, vector<16x32xf32>
    %c0_10 = arith.constant 0 : index
    %c0_11 = arith.constant 0 : index
    %17 = vector.load %arg4[%c0_10, %c0_11] : memref<32x128xf32, #tpu.memory_space<vmem>>, vector<32x128xf32>
    %cst_12 = arith.constant dense<0.000000e+00> : vector<16x32xf32>
    %18 = tpu.matmul %15, %17, %cst_12 {dimension_numbers = #tpu.dot_dimension_numbers<[1], [1], [0], [0], [0, 0, 1, 0], [], []>} : vector<16x128xf32>, vector<32x128xf32>, vector<16x32xf32> -> vector<16x32xf32>
    %19 = arith.addf %16, %18 : vector<16x32xf32>
    %c0_13 = arith.constant 0 : index
    %c0_14 = arith.constant 0 : index
    %20 = vector.load %arg6[%c0_13, %c0_14] : memref<16x32xf32, #tpu.memory_space<vmem>>, vector<16x32xf32>
    tpu.vector_store %arg6[%c0_13, %c0_14], %19 {strides = array<i32>} : memref<16x32xf32, #tpu.memory_space<vmem>>, vector<16x32xf32>,
    %c0_i32_15 = arith.constant 0 : i32
    %21 = arith.cmpi eq, %arg1, %c0_i32_15 : i32
    %22 = arith.extui %21 : i1 to i32
    %c0_i32_16 = arith.constant 0 : i32
    %23 = arith.cmpi ne, %22, %c0_i32_16 : i32
    scf.if %23 {
      %c0_17 = arith.constant 0 : index
      %c0_18 = arith.constant 0 : index
      %24 = vector.load %arg6[%c0_17, %c0_18] : memref<16x32xf32, #tpu.memory_space<vmem>>, vector<16x32xf32>
      %c0_19 = arith.constant 0 : index
      %c0_20 = arith.constant 0 : index
      %25 = vector.load %arg5[%c0_19, %c0_20] : memref<16x32xf32, #tpu.memory_space<vmem>>, vector<16x32xf32>
      tpu.vector_store %arg5[%c0_19, %c0_20], %24 {strides = array<i32>} : memref<16x32xf32, #tpu.memory_space<vmem>>, vector<16x32xf32>,
    } else {
    }
    return
  }
  func.func @transform_0(%arg0: i32, %arg1: i32) -> (i32, i32) {
    %c0_i32 = arith.constant 0 : i32
    %c0_i32_0 = arith.constant 0 : i32
    return %arg0, %c0_i32 : i32, i32
  }
  func.func @transform_1(%arg0: i32, %arg1: i32) -> (i32, i32) {
    %c0_i32 = arith.constant 0 : i32
    %c0_i32_0 = arith.constant 0 : i32
    return %arg1, %c0_i32 : i32, i32
  }
  func.func @transform_2(%arg0: i32, %arg1: i32) -> (i32, i32) {
    %c0_i32 = arith.constant 0 : i32
    %c0_i32_0 = arith.constant 0 : i32
    return %c0_i32, %arg1 : i32, i32
  }
  func.func @transform_3(%arg0: i32, %arg1: i32) -> (i32, i32) {
    %c0_i32 = arith.constant 0 : i32
    %c0_i32_0 = arith.constant 0 : i32
    return %arg0, %c0_i32 : i32, i32
  }
}

</mosaic_0001>

<llo_original>
// kernel: mlp_forward.1
$region0: #{mlp_forward.1}
  #allocation0 [shape = 'u32[]', space=smem, size = 0x4, offset = 0x4, fixed_abs, tag = 'smem constant byte address 0x4 - core index']
  #allocation1 [shape = 'u32[144,128]{1,0:T(1,128)}', space=vmem, size = 0x12000, scoped, tag = 'internal scratch']
  #allocation2 [shape = 'f32[16,32]{1,0:T(8,128)}', space=vmem, size = 0x2000, scoped, tag = 'scratch operand']
  %s0 = inlined_call_operand.hbm [shape: f32[16,32], index: 0, kind: input, shape index: {}]
  %s1 = inlined_call_operand.hbm [shape: f32[128,32], index: 1, kind: input, shape index: {}]
  %s2 = inlined_call_operand.hbm [shape: f32[32,128], index: 2, kind: input, shape index: {}]
  %s3 = inlined_call_operand.hbm [shape: f32[16,32], index: 3, kind: output, shape index: {}]
  %s4 = sld [smem:[#allocation0]]
  $region42: #{mlp_forward.1} parent=0
    _
  %s6 = ssub.s32 1, %s4
  %s7 = scalar_select 0, %s6, %s4
  $region1: #{mlp_forward.1} parent=0
    #allocation3 [shape = 'u8[8192]{0}', space=vmem, size = 0x2000, scoped, tag = 'input window, operand 0, single buffered']
    #allocation4 [shape = 's32[1]{0}', space=sflag, size = 0x4, scoped, tag = 'scoped memory for mlp_forward.1']
    #allocation5 [shape = 's32[1]{0}', space=sflag, size = 0x4, scoped, tag = 'scoped memory for mlp_forward.1']
    #allocation6 [shape = 'u8[65536]{0}', space=vmem, size = 0x10000, scoped, tag = 'input window, operand 1, single buffered']
    #allocation7 [shape = 's32[1]{0}', space=sflag, size = 0x4, scoped, tag = 'scoped memory for mlp_forward.1']
    #allocation8 [shape = 'u8[16384]{0}', space=vmem, size = 0x4000, scoped, tag = 'input window, operand 2, single buffered']
    #allocation9 [shape = 'u8[8192]{0}', space=vmem, size = 0x2000, scoped, tag = 'output window, operand 0, single buffered']
    %8 = vsyncpa [#allocation4], 0
    %9 = vsyncpa [#allocation7], 0
    %10 = vsyncpa [#allocation5], 0
    // Predicated region
    $region2: #{mlp_forward.1} parent=1 // pred_check
      _
    $region3: #{mlp_forward.1} parent=1 // pred_check_branch
      %12 = sbr.rel (0) target = $region5
    $region4: #{mlp_forward.1} parent=1 // pred_region
      %s14 = ssub.s32 256, 256
      %15 = vsyncadd [#allocation4], %s14
      %s16 = sshll.u32 [#allocation3], 4
      %s17 = int_to_ptr.vmem [resolvable:$true] %s16
      %22 = dma.hbm_to_vmem [thread:$0]  %s0, 256, %s17, [#allocation4], 128, 128, 8
    $region5: #{mlp_forward.1} parent=1 // pred_fallthru
      _
    // Predicated region
    $region6: #{mlp_forward.1} parent=1 // pred_check
      _
    $region7: #{mlp_forward.1} parent=1 // pred_check_branch
      %24 = sbr.rel (0) target = $region9
    $region8: #{mlp_forward.1} parent=1 // pred_region
      %s26 = ssub.s32 2048, 2048
      %27 = vsyncadd [#allocation7], %s26
      %s28 = sshll.u32 [#allocation6], 4
      %s29 = int_to_ptr.vmem [resolvable:$true] %s28
      %34 = dma.hbm_to_vmem [thread:$0]  %s1, 2048, %s29, [#allocation7], 128, 128, 8
    $region9: #{mlp_forward.1} parent=1 // pred_fallthru
      _
    // Predicated region
    $region10: #{mlp_forward.1} parent=1 // pred_check
      _
    $region11: #{mlp_forward.1} parent=1 // pred_check_branch
      %36 = sbr.rel (0) target = $region13
    $region12: #{mlp_forward.1} parent=1 // pred_region
      %s38 = ssub.s32 512, 512
      %39 = vsyncadd [#allocation7], %s38
      %s40 = sshll.u32 [#allocation8], 4
      %s41 = int_to_ptr.vmem [resolvable:$true] %s40
      %46 = dma.hbm_to_vmem [thread:$0]  %s2, 512, %s41, [#allocation7], 128, 128, 8
    $region13: #{mlp_forward.1} parent=1 // pred_fallthru
      _
    // Predicated region
    $region14: #{mlp_forward.1} parent=1 // pred_check
      _
    $region15: #{mlp_forward.1} parent=1 // pred_check_branch
      %48 = sbr.rel (0) target = $region17
    $region16: #{mlp_forward.1} parent=1 // pred_region
      %49 = dma.done [#allocation4], 256
    $region17: #{mlp_forward.1} parent=1 // pred_fallthru
      _
    // Predicated region
    $region18: #{mlp_forward.1} parent=1 // pred_check
      _
    $region19: #{mlp_forward.1} parent=1 // pred_check_branch
      %51 = sbr.rel (0) target = $region21
    $region20: #{mlp_forward.1} parent=1 // pred_region
      %52 = dma.done [#allocation7], 2048
    $region21: #{mlp_forward.1} parent=1 // pred_fallthru
      _
    // Predicated region
    $region22: #{mlp_forward.1} parent=1 // pred_check
      _
    $region23: #{mlp_forward.1} parent=1 // pred_check_branch
      %54 = sbr.rel (0) target = $region25
    $region24: #{mlp_forward.1} parent=1 // pred_region
      %55 = dma.done [#allocation7], 512
    $region25: #{mlp_forward.1} parent=1 // pred_fallthru
      _
    %p56 = scmp.eq.s32.totalorder 0, 0
    // Predicated region
    $region26: #{mlp_forward.1} parent=1 // pred_check
      %p57 = pneg %p56
    $region27: #{mlp_forward.1} parent=1 // pred_check_branch
      %59 = sbr.rel (%p57) target = $region29
    $region28: #{mlp_forward.1} parent=1 // pred_region
      %vm60 = vcmask 261120
      %61 = vst.msk [vmem:[#allocation2] sm:$0xff] %vm60, 0.0
      %62 = vst.msk [vmem:[#allocation2 + $0x8] sm:$0xff] %vm60, 0.0
    $region29: #{mlp_forward.1} parent=1 // pred_fallthru
      _
    %v63 = vld [vmem:[#allocation3] sm:$0xff]
    %v64 = vld [vmem:[#allocation3 + $0x8] sm:$0xff]
    %v65 = vld [vmem:[#allocation6] sm:$0xff]
    %v66 = vld [vmem:[#allocation6 + $0x8] sm:$0xff]
    %v67 = vld [vmem:[#allocation6 + $0x10] sm:$0xff]
    %v68 = vld [vmem:[#allocation6 + $0x18] sm:$0xff]
    %v69 = vld [vmem:[#allocation6 + $0x20] sm:$0xff]
    %v70 = vld [vmem:[#allocation6 + $0x28] sm:$0xff]
    %v71 = vld [vmem:[#allocation6 + $0x30] sm:$0xff]
    %v72 = vld [vmem:[#allocation6 + $0x38] sm:$0xff]
    %v73 = vld [vmem:[#allocation6 + $0x40] sm:$0xff]
    %v74 = vld [vmem:[#allocation6 + $0x48] sm:$0xff]
    %v75 = vld [vmem:[#allocation6 + $0x50] sm:$0xff]
    %v76 = vld [vmem:[#allocation6 + $0x58] sm:$0xff]
    %v77 = vld [vmem:[#allocation6 + $0x60] sm:$0xff]
    %v78 = vld [vmem:[#allocation6 + $0x68] sm:$0xff]
    %v79 = vld [vmem:[#allocation6 + $0x70] sm:$0xff]
    %v80 = vld [vmem:[#allocation6 + $0x78] sm:$0xff]
    %vm81 = vcmask 261120
    %v83 = vsel %vm81, %v63, 0
    %v86 = vsel %vm81, %v64, 0
    %v89 = vsel %vm81, %v65, 0
    %v92 = vsel %vm81, %v66, 0
    %v95 = vsel %vm81, %v67, 0
    %v98 = vsel %vm81, %v68, 0
    %v101 = vsel %vm81, %v69, 0
    %v104 = vsel %vm81, %v70, 0
    %v107 = vsel %vm81, %v71, 0
    %v110 = vsel %vm81, %v72, 0
    %v113 = vsel %vm81, %v73, 0
    %v116 = vsel %vm81, %v74, 0
    %v119 = vsel %vm81, %v75, 0
    %v122 = vsel %vm81, %v76, 0
    %v125 = vsel %vm81, %v77, 0
    %v128 = vsel %vm81, %v78, 0
    %v131 = vsel %vm81, %v79, 0
    %v134 = vsel %vm81, %v80, 0
    %136 = vmatprep.subr.mxu0 0.0
    %137 = vmatpush1.xpose.msra.mxu0 %v89
    %138 = vmatprep.subr.mxu0 0.0
    %139 = vmatpush1.xpose.msra.mxu0 %v92
    %140 = vmatprep.subr.mxu0 0.0
    %141 = vmatpush1.xpose.msra.mxu0 %v95
    %142 = vmatprep.subr.mxu0 0.0
    %143 = vmatpush1.xpose.msra.mxu0 %v98
    %144 = vmatprep.subr.mxu0 0.0
    %145 = vmatpush1.xpose.msra.mxu0 %v101
    %146 = vmatprep.subr.mxu0 0.0
    %147 = vmatpush1.xpose.msra.mxu0 %v104
    %148 = vmatprep.subr.mxu0 0.0
    %149 = vmatpush1.xpose.msra.mxu0 %v107
    %150 = vmatprep.subr.mxu0 0.0
    %151 = vmatpush1.xpose.msra.mxu0 %v110
    %152 = vmatprep.subr.mxu0 0.0
    %153 = vmatpush1.xpose.msra.mxu0 %v113
    %154 = vmatprep.subr.mxu0 0.0
    %155 = vmatpush1.xpose.msra.mxu0 %v116
    %156 = vmatprep.subr.mxu0 0.0
    %157 = vmatpush1.xpose.msra.mxu0 %v119
    %158 = vmatprep.subr.mxu0 0.0
    %159 = vmatpush1.xpose.msra.mxu0 %v122
    %160 = vmatprep.subr.mxu0 0.0
    %161 = vmatpush1.xpose.msra.mxu0 %v125
    %162 = vmatprep.subr.mxu0 0.0
    %163 = vmatpush1.xpose.msra.mxu0 %v128
    %164 = vmatprep.subr.mxu0 0.0
    %165 = vmatpush1.xpose.msra.mxu0 %v131
    %166 = vmatprep.subr.mxu0 0.0
    %167 = vmatpush1.xpose.msra.mxu0 %v134
    %168 = vmatprep.subr.mxu0 0.0
    %169 = vmatpush1.xpose.msra.mxu0 0.0
    %170 = vmatprep.subr.mxu0 0.0
    %171 = vmatpush1.xpose.msra.mxu0 0.0
    %172 = vmatprep.subr.mxu0 0.0
    %173 = vmatpush1.xpose.msra.mxu0 0.0
    %174 = vmatprep.subr.mxu0 0.0
    %175 = vmatpush1.xpose.msra.mxu0 0.0
    %176 = vmatprep.subr.mxu0 0.0
    %177 = vmatpush1.xpose.msra.mxu0 0.0
    %178 = vmatprep.subr.mxu0 0.0
    %179 = vmatpush1.xpose.msra.mxu0 0.0
    %180 = vmatprep.subr.mxu0 0.0
    %181 = vmatpush1.xpose.msra.mxu0 0.0
    %182 = vmatprep.subr.mxu0 0.0
    %183 = vmatpush1.xpose.msra.mxu0 0.0
    %184 = vmatprep.subr.mxu0 0.0
    %185 = vmatpush1.xpose.msra.mxu0 0.0
    %186 = vmatprep.subr.mxu0 0.0
    %187 = vmatpush1.xpose.msra.mxu0 0.0
    %188 = vmatprep.subr.mxu0 0.0
    %189 = vmatpush1.xpose.msra.mxu0 0.0
    %190 = vmatprep.subr.mxu0 0.0
    %191 = vmatpush1.xpose.msra.mxu0 0.0
    %192 = vmatprep.subr.mxu0 0.0
    %193 = vmatpush1.xpose.msra.mxu0 0.0
    %194 = vmatprep.subr.mxu0 0.0
    %195 = vmatpush1.xpose.msra.mxu0 0.0
    %196 = vmatprep.subr.mxu0 0.0
    %197 = vmatpush1.xpose.msra.mxu0 0.0
    %198 = vmatprep.subr.mxu0 0.0
    %199 = vmatpush1.xpose.msra.mxu0 0.0
    %200 = vmatprep.mubr.f32.mxu0 0.0
    %201 = vmatmul.mubr.f32.gmra.mrb[0].mxu0 %v83
    %v202 = vpop.f32.mrb[0].mxu0
    %v203 = vadd.f32 0.0, %v202
    %v204 = vpop.f32.mrb[0].mxu0
    %205 = vmatprep.mubr.f32.mxu0 0.0
    %206 = vmatmul.mubr.f32.gmra.mrb[0].mxu0 %v86
    %v207 = vpop.f32.mrb[0].mxu0
    %v208 = vadd.f32 0.0, %v207
    %v209 = vpop.f32.mrb[0].mxu0
    %210 = vdwg.mxu0
    %v211 = vmul.f32 %v203, 0.5
    %v212 = vmul.f32 %v208, 0.5
    %v213 = vmul.f32 %v203, 0.70710677
    %v214 = vmul.f32 %v208, 0.70710677
    %v215 = verf.f32.pop %v213
    %v216 = verf.f32.pop %v214
    %v217 = vadd.f32 %v215, 1.0
    %v218 = vadd.f32 %v216, 1.0
    %v219 = vmul.f32 %v211, %v217
    %v220 = vmul.f32 %v212, %v218
    %v221 = vld [vmem:[#allocation2] sm:$0xff]
    %v222 = vld [vmem:[#allocation2 + $0x8] sm:$0xff]
    %v223 = vld [vmem:[#allocation8] sm:$0xff]
    %v224 = vld [vmem:[#allocation8 + $0x8] sm:$0xff]
    %v225 = vld [vmem:[#allocation8 + $0x10] sm:$0xff]
    %v226 = vld [vmem:[#allocation8 + $0x18] sm:$0xff]
    %227 = vmatprep.subr.mxu0 0.0
    %228 = vmatpush1.xpose.msra.mxu0 %v223
    %229 = vmatprep.subr.mxu0 0.0
    %230 = vmatpush1.xpose.msra.mxu0 %v224
    %231 = vmatprep.subr.mxu0 0.0
    %232 = vmatpush1.xpose.msra.mxu0 %v225
    %233 = vmatprep.subr.mxu0 0.0
    %234 = vmatpush1.xpose.msra.mxu0 %v226
    %235 = vmatprep.subr.mxu0 0.0
    %236 = vmatpush1.xpose.msra.mxu0 0.0
    %237 = vmatprep.subr.mxu0 0.0
    %238 = vmatpush1.xpose.msra.mxu0 0.0
    %239 = vmatprep.subr.mxu0 0.0
    %240 = vmatpush1.xpose.msra.mxu0 0.0
    %241 = vmatprep.subr.mxu0 0.0
    %242 = vmatpush1.xpose.msra.mxu0 0.0
    %243 = vmatprep.subr.mxu0 0.0
    %244 = vmatpush1.xpose.msra.mxu0 0.0
    %245 = vmatprep.subr.mxu0 0.0
    %246 = vmatpush1.xpose.msra.mxu0 0.0
    %247 = vmatprep.subr.mxu0 0.0
    %248 = vmatpush1.xpose.msra.mxu0 0.0
    %249 = vmatprep.subr.mxu0 0.0
    %250 = vmatpush1.xpose.msra.mxu0 0.0
    %251 = vmatprep.subr.mxu0 0.0
    %252 = vmatpush1.xpose.msra.mxu0 0.0
    %253 = vmatprep.subr.mxu0 0.0
    %254 = vmatpush1.xpose.msra.mxu0 0.0
    %255 = vmatprep.subr.mxu0 0.0
    %256 = vmatpush1.xpose.msra.mxu0 0.0
    %257 = vmatprep.subr.mxu0 0.0
    %258 = vmatpush1.xpose.msra.mxu0 0.0
    %259 = vmatprep.subr.mxu0 0.0
    %260 = vmatpush1.xpose.msra.mxu0 0.0
    %261 = vmatprep.subr.mxu0 0.0
    %262 = vmatpush1.xpose.msra.mxu0 0.0
    %263 = vmatprep.subr.mxu0 0.0
    %264 = vmatpush1.xpose.msra.mxu0 0.0
    %265 = vmatprep.subr.mxu0 0.0
    %266 = vmatpush1.xpose.msra.mxu0 0.0
    %267 = vmatprep.subr.mxu0 0.0
    %268 = vmatpush1.xpose.msra.mxu0 0.0
    %269 = vmatprep.subr.mxu0 0.0
    %270 = vmatpush1.xpose.msra.mxu0 0.0
    %271 = vmatprep.subr.mxu0 0.0
    %272 = vmatpush1.xpose.msra.mxu0 0.0
    %273 = vmatprep.subr.mxu0 0.0
    %274 = vmatpush1.xpose.msra.mxu0 0.0
    %275 = vmatprep.subr.mxu0 0.0
    %276 = vmatpush1.xpose.msra.mxu0 0.0
    %277 = vmatprep.subr.mxu0 0.0
    %278 = vmatpush1.xpose.msra.mxu0 0.0
    %279 = vmatprep.subr.mxu0 0.0
    %280 = vmatpush1.xpose.msra.mxu0 0.0
    %281 = vmatprep.subr.mxu0 0.0
    %282 = vmatpush1.xpose.msra.mxu0 0.0
    %283 = vmatprep.subr.mxu0 0.0
    %284 = vmatpush1.xpose.msra.mxu0 0.0
    %285 = vmatprep.subr.mxu0 0.0
    %286 = vmatpush1.xpose.msra.mxu0 0.0
    %287 = vmatprep.subr.mxu0 0.0
    %288 = vmatpush1.xpose.msra.mxu0 0.0
    %289 = vmatprep.subr.mxu0 0.0
    %290 = vmatpush1.xpose.msra.mxu0 0.0
    %291 = vmatprep.mubr.f32.mxu0 0.0
    %292 = vmatmul.mubr.f32.gmra.mrb[0].mxu0 %v219
    %v293 = vpop.f32.mrb[0].mxu0
    %v294 = vadd.f32 0.0, %v293
    %v295 = vpop.f32.mrb[0].mxu0
    %296 = vmatprep.mubr.f32.mxu0 0.0
    %297 = vmatmul.mubr.f32.gmra.mrb[0].mxu0 %v220
    %v298 = vpop.f32.mrb[0].mxu0
    %v299 = vadd.f32 0.0, %v298
    %v300 = vpop.f32.mrb[0].mxu0
    %301 = vdwg.mxu0
    %v302 = vadd.f32 %v221, %v294
    %v303 = vadd.f32 %v222, %v299
    %304 = vst.msk [vmem:[#allocation2] sm:$0xff] %vm81, %v302
    %305 = vst.msk [vmem:[#allocation2 + $0x8] sm:$0xff] %vm81, %v303
    // Predicated region
    $region30: #{mlp_forward.1} parent=1 // pred_check
      %p306 = pneg %p56
    $region31: #{mlp_forward.1} parent=1 // pred_check_branch
      %308 = sbr.rel (%p306) target = $region33
    $region32: #{mlp_forward.1} parent=1 // pred_region
      %v309 = vld [vmem:[#allocation2] sm:$0xff]
      %v310 = vld [vmem:[#allocation2 + $0x8] sm:$0xff]
      %311 = vst.msk [vmem:[#allocation9] sm:$0xff] %vm81, %v309
      %312 = vst.msk [vmem:[#allocation9 + $0x8] sm:$0xff] %vm81, %v310
    $region33: #{mlp_forward.1} parent=1 // pred_fallthru
      _
    // Predicated region
    $region34: #{mlp_forward.1} parent=1 // pred_check
      _
    $region35: #{mlp_forward.1} parent=1 // pred_check_branch
      %314 = sbr.rel (0) target = $region37
    $region36: #{mlp_forward.1} parent=1 // pred_region
      %s316 = ssub.s32 256, 256
      %317 = vsyncadd [#allocation5], %s316
      %s318 = sshll.u32 [#allocation9], 4
      %s319 = int_to_ptr.vmem [resolvable:$true] %s318
      %324 = dma.vmem_to_hbm [thread:$0]  %s319, 256, %s3, [#allocation5], 128, 128, 8
    $region37: #{mlp_forward.1} parent=1 // pred_fallthru
      _
    // Predicated region
    $region38: #{mlp_forward.1} parent=1 // pred_check
      _
    $region39: #{mlp_forward.1} parent=1 // pred_check_branch
      %326 = sbr.rel (0) target = $region41
    $region40: #{mlp_forward.1} parent=1 // pred_region
      %327 = dma.done [#allocation5], 256
    $region41: #{mlp_forward.1} parent=1 // pred_fallthru
      _
    %328 = vsyncpa [#allocation4], 1
    %329 = vsyncpa [#allocation7], 1
    %330 = vsyncpa [#allocation5], 1

</llo_original>
